<compile_context>
chip_gen: v6e
topology: v6e:2x2x1
jax: 0.10.0
libtpu: 0.0.40
codegen_flags: <defaults>
</compile_context>

<pallas_src>
import jax
import jax.numpy as jnp
from jax.experimental import pallas as pl
from jax.experimental.pallas import tpu as pltpu

_GRAY_R, _GRAY_G, _GRAY_B = 0.2989, 0.587, 0.114


def _cutouts_kernel(x_ref, wy_ref, wxt_ref, out_ref):
    # x_ref:   [3, H, tw]    one image (W tile), batch dim squeezed
    # wy_ref:  [cut, H]      height-resize weights (pad folded in)
    # wxt_ref: [tw, cut]     width-resize weights, transposed (W-tile slice)
    # out_ref: [3*cut, cut]  R, G, B planes stacked on sublanes (resident over k)
    k = pl.program_id(1)

    wy = wy_ref[...]

    # Stage 1 (MXU): height resize, one matmul per channel.
    t0 = jnp.dot(wy, x_ref[0], preferred_element_type=jnp.float32)   # [cut, tw]
    t1 = jnp.dot(wy, x_ref[1], preferred_element_type=jnp.float32)
    t2 = jnp.dot(wy, x_ref[2], preferred_element_type=jnp.float32)

    # Stage 2 (MXU): one wide matmul for all three planes.
    stacked = jnp.concatenate([t0, t1, t2], axis=0).astype(wxt_ref.dtype)
    partial = jnp.dot(stacked, wxt_ref[...],
                      preferred_element_type=jnp.float32)            # [3*cut, cut]

    # Accumulate over W tiles directly in the resident output block.
    @pl.when(k == 0)
    def _():
        out_ref[...] = jnp.zeros_like(out_ref)

    out_ref[...] += partial


def _linear_resize_matrix(in_size, out_size):
    """Separable bilinear (align_corners=False) resize weights, shape [out, in]."""
    scale = in_size / out_size
    q = jnp.arange(out_size, dtype=jnp.float32)
    src = (q + 0.5) * scale - 0.5
    i0 = jnp.floor(src)
    frac = src - i0
    lo = jnp.clip(i0, 0, in_size - 1).astype(jnp.int32)
    hi = jnp.clip(i0 + 1.0, 0, in_size - 1).astype(jnp.int32)
    w = (jax.nn.one_hot(lo, in_size, dtype=jnp.float32) * (1.0 - frac)[:, None]
         + jax.nn.one_hot(hi, in_size, dtype=jnp.float32) * frac[:, None])
    return w


def _choose_w_tile(W, H, itemsize):
    """Largest W tile keeping the (3, H, tw) input block under ~8 MiB, subject to
    TPU lane tiling (tw % 128 == 0) and tw | W.  Returns W when tiling is
    impossible or unnecessary."""
    max_block_bytes = 8 << 20
    if 3 * H * W * itemsize <= max_block_bytes or W % 128 != 0:
        return W
    tw = W
    while (tw % 2 == 0 and (tw // 2) % 128 == 0
           and 3 * H * tw * itemsize > max_block_bytes):
        tw //= 2
    return tw


def make_cutouts_dango(x, cut_size, Overview=4, InnerCrop=0,
                       IC_Size_Pow=0.5, IC_Grey_P=0.2, skip_augs=True,
                       use_bf16=False):
    N, C, sideY, sideX = x.shape
    assert C == 3, "MakeCutoutsDango expects RGB (3-channel) input"
    max_size = min(sideX, sideY)
    cut = cut_size

    # F.pad(input, ((sideY-max)//2,)*2 + ((sideX-max)//2,)*2): PyTorch pads the
    # last dim (W) by (sideY-max)//2 and H by (sideX-max)//2; mirrored here for
    # parity.  The zero padding is folded into the resize matrices instead of
    # materializing a padded copy in HBM.
    pw = (sideY - max_size) // 2          # pad on W (last dim)
    ph = (sideX - max_size) // 2          # pad on H
    Hp, Wp = sideY + 2 * ph, sideX + 2 * pw

    wy = _linear_resize_matrix(Hp, cut)[:, ph:ph + sideY]     # [cut, sideY]
    wx = _linear_resize_matrix(Wp, cut)[:, pw:pw + sideX]     # [cut, sideX]
    wxt = wx.T                                                # [sideX, cut]

    comp_dtype = jnp.bfloat16 if use_bf16 else jnp.float32    # bf16: v5e lever
    xc = x.astype(comp_dtype)
    wy = wy.astype(comp_dtype)
    wxt = wxt.astype(comp_dtype)

    H, W = sideY, sideX
    itemsize = jnp.dtype(comp_dtype).itemsize
    tw = _choose_w_tile(W, H, itemsize)
    n_wt = W // tw

    # VMEM budget: double-buffered blocks + stage-1/2 intermediates, plus slack.
    need = (2 * 3 * H * tw * itemsize          # input blocks (double-buffered)
            + 2 * cut * H * itemsize           # wy
            + 2 * tw * cut * itemsize          # wxt
            + 2 * 3 * cut * cut * 4            # output block
            + 3 * 3 * cut * tw * 4)            # stage-1 products + stacked operand
    vmem_limit = int(min(max(need + (8 << 20), 32 << 20), 100 << 20))

    planes = pl.pallas_call(
        _cutouts_kernel,
        out_shape=jax.ShapeDtypeStruct((N, 3 * cut, cut), jnp.float32),
        grid=(N, n_wt),
        in_specs=[
            pl.BlockSpec((None, 3, H, tw), lambda b, k: (b, 0, 0, k)),
            pl.BlockSpec((cut, H), lambda b, k: (0, 0)),
            pl.BlockSpec((tw, cut), lambda b, k: (k, 0)),
        ],
        out_specs=pl.BlockSpec((None, 3 * cut, cut), lambda b, k: (b, 0, 0)),
        compiler_params=pltpu.CompilerParams(
            dimension_semantics=("parallel", "arbitrary"),
            vmem_limit_bytes=vmem_limit),
    )(xc, wy, wxt)                                            # [N, 3*cut, cut]

    plain = planes.reshape(N, 3, cut, cut)                    # resized RGB
    # Grayscale commutes with the linear resize -> compute from resized planes.
    gray = (_GRAY_R * plain[:, 0] + _GRAY_G * plain[:, 1]
            + _GRAY_B * plain[:, 2])
    gray3 = jnp.broadcast_to(gray[:, None], (N, 3, cut, cut))

    if Overview <= 0:
        return jnp.zeros((0, 3, cut, cut), jnp.float32)
    if Overview <= 4:
        variants = [plain, gray3, plain[..., ::-1], gray3[..., ::-1]][:Overview]
    else:
        variants = [plain] * Overview
    # torch.cat order: all images for variant 0, then variant 1, ...
    cutouts = jnp.concatenate(variants, axis=0)

    # TODO(synk): InnerCrop > 0 needs per-cut random crop sizes (dynamic shapes
    # per cut); not implemented here.
    # TODO(synk): the stochastic torchvision augs (RandomHorizontalFlip, noise,
    # RandomAffine, RandomGrayscale, ColorJitter) are skipped -> this behaves
    # like forward(..., skip_augs=True).
    # TODO(synk): disco-diffusion's `resize` is resize_right (antialiased cubic);
    # here a separable bilinear (align_corners=False) resampler is used.
    return cutouts


if __name__ == "__main__":
    cut_size = 8
    key = jax.random.PRNGKey(0)
    k1, k2 = jax.random.split(key)

    # Case 1: square input (no padding), batch of 2.
    x = jax.random.uniform(k1, (2, 3, 16, 16), dtype=jnp.float32)
    out = jax.block_until_ready(make_cutouts_dango(x, cut_size, Overview=4))
    assert out.shape == (8, 3, cut_size, cut_size), out.shape

    wy_r = _linear_resize_matrix(16, cut_size)
    wx_r = _linear_resize_matrix(16, cut_size)
    ref_res = jnp.einsum('qh,nchw,kw->ncqk', wy_r, x, wx_r)
    ref_gray = (_GRAY_R * ref_res[:, 0] + _GRAY_G * ref_res[:, 1]
                + _GRAY_B * ref_res[:, 2])
    ref_gray3 = jnp.broadcast_to(ref_gray[:, None], ref_res.shape)
    ref = jnp.concatenate(
        [ref_res, ref_gray3, ref_res[..., ::-1], ref_gray3[..., ::-1]], axis=0)
    assert jnp.allclose(out, ref, atol=1e-3, rtol=1e-3), \
        float(jnp.max(jnp.abs(out - ref)))

    # Case 2: non-square input exercises the folded-in zero padding (no jnp.pad
    # in the kernel path; the reference below pads explicitly).
    x2 = jax.random.uniform(k2, (1, 3, 16, 24), dtype=jnp.float32)
    out2 = jax.block_until_ready(make_cutouts_dango(x2, cut_size, Overview=4))
    assert out2.shape == (4, 3, cut_size, cut_size), out2.shape

    xp2 = jnp.pad(x2, ((0, 0), (0, 0), (4, 4), (0, 0)))   # H padded by (24-16)//2
    wy2 = _linear_resize_matrix(24, cut_size)
    wx2 = _linear_resize_matrix(24, cut_size)
    r2 = jnp.einsum('qh,nchw,kw->ncqk', wy2, xp2, wx2)
    g2 = _GRAY_R * r2[:, 0] + _GRAY_G * r2[:, 1] + _GRAY_B * r2[:, 2]
    g2_3 = jnp.broadcast_to(g2[:, None], r2.shape)
    ref2 = jnp.concatenate([r2, g2_3, r2[..., ::-1], g2_3[..., ::-1]], axis=0)
    assert jnp.allclose(out2, ref2, atol=1e-3, rtol=1e-3), \
        float(jnp.max(jnp.abs(out2 - ref2)))

    print("KERNEL_OK")
</pallas_src>

<mosaic_0001>
module attributes {stable_mosaic.version = 11 : i64} {
  func.func @_cutouts_kernel(%arg0: i32, %arg1: i32, %arg2: memref<1x3x16x16xf32, #tpu.memory_space<vmem>>, %arg3: memref<8x16xf32, #tpu.memory_space<vmem>>, %arg4: memref<16x8xf32, #tpu.memory_space<vmem>>, %arg5: memref<1x24x8xf32, #tpu.memory_space<vmem>>) attributes {dimension_semantics = [#tpu.dimension_semantics<parallel>, #tpu.dimension_semantics<arbitrary>], iteration_bounds = array<i64: 2, 1>, scalar_prefetch = 0 : i64, scratch_operands = 0 : i64, tpu.core_type = #tpu.core_type<tc>, window_params = [{transform_indices = @transform_0, window_bounds = array<i64: 1, 3, 16, 16>}, {pipeline_mode = #tpu.pipeline_mode<synchronous>, transform_indices = @transform_1, window_bounds = array<i64: 8, 16>}, {transform_indices = @transform_2, window_bounds = array<i64: 16, 8>}, {transform_indices = @transform_3, window_bounds = array<i64: 1, 24, 8>}]} {
    %c0 = arith.constant 0 : index
    %c0_0 = arith.constant 0 : index
    %0 = vector.load %arg3[%c0, %c0_0] : memref<8x16xf32, #tpu.memory_space<vmem>>, vector<8x16xf32>
    %c0_1 = arith.constant 0 : index
    %c0_2 = arith.constant 0 : index
    %c0_3 = arith.constant 0 : index
    %c0_4 = arith.constant 0 : index
    %1 = vector.load %arg2[%c0_1, %c0_2, %c0_3, %c0_4] : memref<1x3x16x16xf32, #tpu.memory_space<vmem>>, vector<1x1x16x16xf32>
    %2 = vector.shape_cast %1 : vector<1x1x16x16xf32> to vector<16x16xf32>
    %cst = arith.constant dense<0.000000e+00> : vector<8x16xf32>
    %3 = tpu.matmul %0, %2, %cst {dimension_numbers = #tpu.dot_dimension_numbers<[1], [0], [0], [1], [0, 0, 1, 1], [], []>} : vector<8x16xf32>, vector<16x16xf32>, vector<8x16xf32> -> vector<8x16xf32>
    %c0_5 = arith.constant 0 : index
    %c1 = arith.constant 1 : index
    %c0_6 = arith.constant 0 : index
    %c0_7 = arith.constant 0 : index
    %4 = vector.load %arg2[%c0_5, %c1, %c0_6, %c0_7] : memref<1x3x16x16xf32, #tpu.memory_space<vmem>>, vector<1x1x16x16xf32>
    %5 = vector.shape_cast %4 : vector<1x1x16x16xf32> to vector<16x16xf32>
    %cst_8 = arith.constant dense<0.000000e+00> : vector<8x16xf32>
    %6 = tpu.matmul %0, %5, %cst_8 {dimension_numbers = #tpu.dot_dimension_numbers<[1], [0], [0], [1], [0, 0, 1, 1], [], []>} : vector<8x16xf32>, vector<16x16xf32>, vector<8x16xf32> -> vector<8x16xf32>
    %c0_9 = arith.constant 0 : index
    %c2 = arith.constant 2 : index
    %c0_10 = arith.constant 0 : index
    %c0_11 = arith.constant 0 : index
    %7 = vector.load %arg2[%c0_9, %c2, %c0_10, %c0_11] : memref<1x3x16x16xf32, #tpu.memory_space<vmem>>, vector<1x1x16x16xf32>
    %8 = vector.shape_cast %7 : vector<1x1x16x16xf32> to vector<16x16xf32>
    %cst_12 = arith.constant dense<0.000000e+00> : vector<8x16xf32>
    %9 = tpu.matmul %0, %8, %cst_12 {dimension_numbers = #tpu.dot_dimension_numbers<[1], [0], [0], [1], [0, 0, 1, 1], [], []>} : vector<8x16xf32>, vector<16x16xf32>, vector<8x16xf32> -> vector<8x16xf32>
    %10 = tpu.concatenate %3, %6, %9 in 0 : vector<8x16xf32>, vector<8x16xf32>, vector<8x16xf32> -> vector<24x16xf32>
    %c0_13 = arith.constant 0 : index
    %c0_14 = arith.constant 0 : index
    %11 = vector.load %arg4[%c0_13, %c0_14] : memref<16x8xf32, #tpu.memory_space<vmem>>, vector<16x8xf32>
    %cst_15 = arith.constant dense<0.000000e+00> : vector<24x8xf32>
    %12 = tpu.matmul %10, %11, %cst_15 {dimension_numbers = #tpu.dot_dimension_numbers<[1], [0], [0], [1], [0, 0, 1, 1], [], []>} : vector<24x16xf32>, vector<16x8xf32>, vector<24x8xf32> -> vector<24x8xf32>
    %c0_i32 = arith.constant 0 : i32
    %13 = arith.cmpi eq, %arg1, %c0_i32 : i32
    %14 = arith.extui %13 : i1 to i32
    %c0_i32_16 = arith.constant 0 : i32
    %15 = arith.cmpi ne, %14, %c0_i32_16 : i32
    scf.if %15 {
      %cst_23 = arith.constant 0.000000e+00 : f32
      %22 = vector.broadcast %cst_23 : f32 to vector<24x8xf32>
      %c0_24 = arith.constant 0 : index
      %c0_25 = arith.constant 0 : index
      %c0_26 = arith.constant 0 : index
      %23 = vector.load %arg5[%c0_24, %c0_25, %c0_26] : memref<1x24x8xf32, #tpu.memory_space<vmem>>, vector<1x24x8xf32>
      %24 = vector.shape_cast %23 : vector<1x24x8xf32> to vector<24x8xf32>
      %25 = vector.shape_cast %22 : vector<24x8xf32> to vector<1x24x8xf32>
      tpu.vector_store %arg5[%c0_24, %c0_25, %c0_26], %25 {strides = array<i32>} : memref<1x24x8xf32, #tpu.memory_space<vmem>>, vector<1x24x8xf32>,
    } else {
    }
    %c0_17 = arith.constant 0 : index
    %c0_18 = arith.constant 0 : index
    %c0_19 = arith.constant 0 : index
    %16 = vector.load %arg5[%c0_17, %c0_18, %c0_19] : memref<1x24x8xf32, #tpu.memory_space<vmem>>, vector<1x24x8xf32>
    %17 = vector.shape_cast %16 : vector<1x24x8xf32> to vector<24x8xf32>
    %18 = arith.addf %17, %12 : vector<24x8xf32>
    %c0_20 = arith.constant 0 : index
    %c0_21 = arith.constant 0 : index
    %c0_22 = arith.constant 0 : index
    %19 = vector.load %arg5[%c0_20, %c0_21, %c0_22] : memref<1x24x8xf32, #tpu.memory_space<vmem>>, vector<1x24x8xf32>
    %20 = vector.shape_cast %19 : vector<1x24x8xf32> to vector<24x8xf32>
    %21 = vector.shape_cast %18 : vector<24x8xf32> to vector<1x24x8xf32>
    tpu.vector_store %arg5[%c0_20, %c0_21, %c0_22], %21 {strides = array<i32>} : memref<1x24x8xf32, #tpu.memory_space<vmem>>, vector<1x24x8xf32>,
    return
  }
  func.func @transform_0(%arg0: i32, %arg1: i32) -> (i32, i32, i32, i32) {
    %c0_i32 = arith.constant 0 : i32
    %c0_i32_0 = arith.constant 0 : i32
    %c0_i32_1 = arith.constant 0 : i32
    return %arg0, %c0_i32, %c0_i32_0, %arg1 : i32, i32, i32, i32
  }
  func.func @transform_1(%arg0: i32, %arg1: i32) -> (i32, i32) {
    %c0_i32 = arith.constant 0 : i32
    %c0_i32_0 = arith.constant 0 : i32
    %c0_i32_1 = arith.constant 0 : i32
    return %c0_i32, %c0_i32_0 : i32, i32
  }
  func.func @transform_2(%arg0: i32, %arg1: i32) -> (i32, i32) {
    %c0_i32 = arith.constant 0 : i32
    %c0_i32_0 = arith.constant 0 : i32
    return %arg1, %c0_i32 : i32, i32
  }
  func.func @transform_3(%arg0: i32, %arg1: i32) -> (i32, i32, i32) {
    %c0_i32 = arith.constant 0 : i32
    %c0_i32_0 = arith.constant 0 : i32
    %c0_i32_1 = arith.constant 0 : i32
    return %arg0, %c0_i32, %c0_i32_0 : i32, i32, i32
  }
}

</mosaic_0001>

<llo_original>
// kernel: tpu_custom_call.1
$region0: #{tpu_custom_call.1}
  #allocation0 [shape = 'u32[]', space=smem, size = 0x4, offset = 0x4, fixed_abs, tag = 'smem constant byte address 0x4 - core index']
  #allocation1 [shape = 'u32[144,128]{1,0:T(1,128)}', space=vmem, size = 0x12000, scoped, tag = 'internal scratch']
  %s0 = inlined_call_operand.hbm [shape: f32[2,3,16,16], index: 0, kind: input, shape index: {}]
  %s1 = inlined_call_operand.vmem [shape: f32[8,16], index: 1, kind: input, shape index: {}]
  %s2 = inlined_call_operand.vmem [shape: f32[16,8], index: 2, kind: input, shape index: {}]
  %s3 = inlined_call_operand.vmem [shape: f32[2,24,8], index: 3, kind: output, shape index: {}]
  %s4 = sld [smem:[#allocation0]]
  $region53: #{tpu_custom_call.1} parent=0
    _
  %s6 = ssub.s32 1, %s4
  %s7 = scalar_select 0, %s6, %s4
  $region1: #{tpu_custom_call.1} parent=0
    #allocation2 [shape = 'u8[49152]{0}', space=vmem, size = 0xc000, scoped, tag = 'input window, operand 0']
    #allocation3 [shape = 's32[2]{0}', space=sflag, size = 0x8, scoped, tag = 'scoped memory for tpu_custom_call.1']
    %8 = vsyncpa [#allocation3], 0
    %s9 = scalar_lea.sflag [#allocation3], 1
    %10 = vsyncpa %s9, 0
    loop: start=0, step=1, limit=4
    $region2: #{tpu_custom_call.1} parent=1 // loop_pre_header
      _
    $region3: #{tpu_custom_call.1} parent=1 // loop_header
      %s12 = sphi 0, %s16
      %p13 = scmp.ge.s32.totalorder %s12, 4
      %s19 = sphi 0, %s31
      %s20 = sphi 0, %s27
      %s21 = sphi 0, %s19
      %s22 = sphi 0, %s20
      %s23 = sphi 0, %s21
      %s24 = sphi 0, %s22
      %s36 = sphi 0, %s38
      %s39 = sphi 0, %s36
      %s40 = sphi 0, %s39
      %s56 = sphi 0, %s40
      %s60 = sphi 0, %s60
      %s62 = sphi 0, %s60
      %s63 = sphi 0, %s62
      %s77 = sphi 0, %s63
      %s83 = sphi 0, %s85
      %s86 = sphi 0, %s83
      %s87 = sphi 0, %s86
      %s103 = sphi 0, %s87
      %s109 = sphi 0, %s111
      %s112 = sphi 0, %s109
      %s113 = sphi 0, %s112
      %s129 = sphi 0, %s113
    $region4: #{tpu_custom_call.1} parent=1 // loop_header_branch
      %15 = sbr.rel (%p13) target = $region8
    $region5: #{tpu_custom_call.1} parent=1 // loop_body
      %s17 = ssub.s32 %s12, 1
      %s18 = ssub.s32 %s12, 2
      %s25 = sadd.s32 1, %s20
      %p26 = scmp.ge.s32.totalorder %s25, 1
      %s27 = scalar_select %p26, 0, %s25
      %s28 = sadd.s32 1, %s19
      %s29 = scalar_select %p26, %s28, %s19
      %p30 = scmp.ge.s32.totalorder %s29, 2
      %s31 = scalar_select %p30, 0, %s29
      %s32 = ssub.s32 %s19, %s31
      %s33 = ssub.s32 %s20, %s27
      %s34 = sor.u32 %s32, %s33
      %p35 = scmp.eq.s32.totalorder %s34, 0
      %s37 = sadd.s32 %s36, 1
      %s38 = scalar_select %p35, %s36, %s37
      %p41 = pneg %p35
      %p42 = scmp.eq.s32.totalorder %s12, 1
      %p43 = por %p41, %p42
      %p44 = scmp.ne.s32.totalorder %s36, %s39
      %p45 = scmp.eq.s32.totalorder %s12, 0
      %p46 = por %p44, %p45
      %p47 = scmp.ne.s32.totalorder %s36, %s39
      %p48 = scmp.eq.s32.totalorder %s17, 1
      %p49 = por %p47, %p48
      %p50 = scmp.ne.s32.totalorder %s39, %s40
      %p51 = scmp.eq.s32.totalorder %s17, 0
      %p52 = por %p50, %p51
      %p53 = scmp.ne.s32.totalorder %s39, %s40
      %p54 = scmp.eq.s32.totalorder %s18, 1
      %p55 = por %p53, %p54
      %p57 = scmp.ne.s32.totalorder %s40, %s56
      %p58 = scmp.eq.s32.totalorder %s18, 0
      %p59 = por %p57, %p58
      %s61 = sadd.s32 %s60, 1
      %p64 = scmp.eq.s32.totalorder %s12, 1
      %p65 = scmp.ne.s32.totalorder %s60, %s62
      %p66 = scmp.eq.s32.totalorder %s12, 0
      %p67 = por %p65, %p66
      %p68 = scmp.ne.s32.totalorder %s60, %s62
      %p69 = scmp.eq.s32.totalorder %s17, 1
      %p70 = por %p68, %p69
      %p71 = scmp.ne.s32.totalorder %s62, %s63
      %p72 = scmp.eq.s32.totalorder %s17, 0
      %p73 = por %p71, %p72
      %p74 = scmp.ne.s32.totalorder %s62, %s63
      %p75 = scmp.eq.s32.totalorder %s18, 1
      %p76 = por %p74, %p75
      %p78 = scmp.ne.s32.totalorder %s63, %s77
      %p79 = scmp.eq.s32.totalorder %s18, 0
      %p80 = por %p78, %p79
      %s81 = ssub.s32 %s20, %s27
      %p82 = scmp.eq.s32.totalorder %s81, 0
      %s84 = sadd.s32 %s83, 1
      %s85 = scalar_select %p82, %s83, %s84
      %p88 = pneg %p82
      %p89 = scmp.eq.s32.totalorder %s12, 1
      %p90 = por %p88, %p89
      %p91 = scmp.ne.s32.totalorder %s83, %s86
      %p92 = scmp.eq.s32.totalorder %s12, 0
      %p93 = por %p91, %p92
      %p94 = scmp.ne.s32.totalorder %s83, %s86
      %p95 = scmp.eq.s32.totalorder %s17, 1
      %p96 = por %p94, %p95
      %p97 = scmp.ne.s32.totalorder %s86, %s87
      %p98 = scmp.eq.s32.totalorder %s17, 0
      %p99 = por %p97, %p98
      %p100 = scmp.ne.s32.totalorder %s86, %s87
      %p101 = scmp.eq.s32.totalorder %s18, 1
      %p102 = por %p100, %p101
      %p104 = scmp.ne.s32.totalorder %s87, %s103
      %p105 = scmp.eq.s32.totalorder %s18, 0
      %p106 = por %p104, %p105
      %s107 = ssub.s32 %s19, %s31
      %p108 = scmp.eq.s32.totalorder %s107, 0
      %s110 = sadd.s32 %s109, 1
      %s111 = scalar_select %p108, %s109, %s110
      %p114 = pneg %p108
      %p115 = scmp.eq.s32.totalorder %s12, 1
      %p116 = por %p114, %p115
      %p117 = scmp.ne.s32.totalorder %s109, %s112
      %p118 = scmp.eq.s32.totalorder %s12, 0
      %p119 = por %p117, %p118
      %p120 = scmp.ne.s32.totalorder %s109, %s112
      %p121 = scmp.eq.s32.totalorder %s17, 1
      %p122 = por %p120, %p121
      %p123 = scmp.ne.s32.totalorder %s112, %s113
      %p124 = scmp.eq.s32.totalorder %s17, 0
      %p125 = por %p123, %p124
      %p126 = scmp.ne.s32.totalorder %s112, %s113
      %p127 = scmp.eq.s32.totalorder %s18, 1
      %p128 = por %p126, %p127
      %p130 = scmp.ne.s32.totalorder %s113, %s129
      %p131 = scmp.eq.s32.totalorder %s18, 0
      %p132 = por %p130, %p131
      %p133 = scmp.le.s32.totalorder 1, %s12
      %p134 = scmp.lt.s32.totalorder %s12, 3
      %p135 = pnand %p133, %p134
      %p136 = pneg %p135
      // Predicated region
      $region9: #{tpu_custom_call.1} parent=5 // pred_check
        _
      $region10: #{tpu_custom_call.1} parent=5 // pred_check_branch
        %138 = sbr.rel (%p135) target = $region12
      $region11: #{tpu_custom_call.1} parent=5 // pred_region
        %s139 = ssub.s32 %s12, 1
        // Predicated region
        $region13: #{tpu_custom_call.1} parent=11 // pred_check
          %p140 = pneg %p73
        $region14: #{tpu_custom_call.1} parent=11 // pred_check_branch
          %142 = sbr.rel (%p140) target = $region16
        $region15: #{tpu_custom_call.1} parent=11 // pred_region
          _
        $region16: #{tpu_custom_call.1} parent=11 // pred_fallthru
          _
        // Predicated region
        $region17: #{tpu_custom_call.1} parent=11 // pred_check
          %p143 = pneg %p99
        $region18: #{tpu_custom_call.1} parent=11 // pred_check_branch
          %145 = sbr.rel (%p143) target = $region20
        $region19: #{tpu_custom_call.1} parent=11 // pred_region
          %s146 = smul.u32 2, %s22
          %p147 = scmp.lt.s32.totalorder %s146, 1
          %s148 = scalar_select %p147, %s146, 1
          %s149 = smul.addr %s148, 8
          %s150 = scalar_lea.vmem %s2, %s149
          %s151 = smul.u32 2, %s22
        $region20: #{tpu_custom_call.1} parent=11 // pred_fallthru
          _
      $region12: #{tpu_custom_call.1} parent=5 // pred_fallthru
        _
      %p152 = scmp.lt.s32.totalorder %s12, 2
      // Predicated region
      $region21: #{tpu_custom_call.1} parent=5 // pred_check
        %p153 = pneg %p152
      $region22: #{tpu_custom_call.1} parent=5 // pred_check_branch
        %155 = sbr.rel (%p153) target = $region24
      $region23: #{tpu_custom_call.1} parent=5 // pred_region
        // Predicated region
        $region25: #{tpu_custom_call.1} parent=23 // pred_check
          %p156 = pneg %p46
        $region26: #{tpu_custom_call.1} parent=23 // pred_check_branch
          %158 = sbr.rel (%p156) target = $region28
        $region27: #{tpu_custom_call.1} parent=23 // pred_region
          %s159 = sand.u32 %s36, 1
          %s160 = scalar_lea.sflag [#allocation3], %s159
          %s161 = sand.u32 %s36, 1
          %s162 = smul.addr %s161, 48
          %s163 = scalar_lea.vmem [#allocation2], %s162
          %s165 = ssub.s32 768, 768
          %166 = vsyncadd %s160, %s165
          %s167 = smul.addr %s19, 6
          %s168 = sadd.s32 %s20, %s167
          %s169 = smul.addr %s168, 128
          %s170 = scalar_lea.hbm %s0, %s169
          %s171 = sshll.u32 %s163, 4
          %s172 = int_to_ptr.vmem [resolvable:$true] %s171
          %177 = dma.hbm_to_vmem [thread:$0]  %s170, 768, %s172, %s160, 128, 128, 8
        $region28: #{tpu_custom_call.1} parent=23 // pred_fallthru
          _
      $region24: #{tpu_custom_call.1} parent=5 // pred_fallthru
        _
      %p178 = scmp.le.s32.totalorder 1, %s12
      %p179 = scmp.lt.s32.totalorder %s12, 3
      %p180 = pnand %p178, %p179
      %p181 = pneg %p180
      // Predicated region
      $region29: #{tpu_custom_call.1} parent=5 // pred_check
        _
      $region30: #{tpu_custom_call.1} parent=5 // pred_check_branch
        %183 = sbr.rel (%p180) target = $region32
      $region31: #{tpu_custom_call.1} parent=5 // pred_region
        %s184 = ssub.s32 %s12, 1
        %s185 = sand.u32 %s39, 1
        %s186 = scalar_lea.sflag [#allocation3], %s185
        %s187 = sand.u32 %s39, 1
        %s188 = smul.addr %s187, 48
        %s189 = scalar_lea.vmem [#allocation2], %s188
        // Predicated region
        $region33: #{tpu_custom_call.1} parent=31 // pred_check
          %p190 = pneg %p52
        $region34: #{tpu_custom_call.1} parent=31 // pred_check_branch
          %192 = sbr.rel (%p190) target = $region36
        $region35: #{tpu_custom_call.1} parent=31 // pred_region
          %193 = dma.done %s186, 768
        $region36: #{tpu_custom_call.1} parent=31 // pred_fallthru
          _
        %s194 = sand.u32 %s39, 1
        %s195 = scalar_lea.sflag [#allocation3], %s194
        %s196 = sand.u32 %s39, 1
        %s197 = smul.addr %s196, 48
        %s198 = scalar_lea.vmem [#allocation2], %s197
        %p199 = pneg %p52
        %p200 = pneg %p49
        %p201 = pneg %p73
        %p202 = pneg %p70
        %s203 = smul.u32 2, %s22
        %p204 = scmp.lt.s32.totalorder %s203, 1
        %s205 = scalar_select %p204, %s203, 1
        %s206 = smul.addr %s205, 8
        %s207 = scalar_lea.vmem %s2, %s206
        %p208 = pneg %p99
        %p209 = pneg %p96
        %p210 = pneg %p125
        %p211 = pneg %p122
        %p212 = scmp.lt.s32.totalorder %s21, 1
        %s213 = scalar_select %p212, %s21, 1
        %s214 = smul.addr %s213, 3
        %s215 = smul.addr %s214, 8
        %s216 = scalar_lea.vmem %s3, %s215
        %s217 = smul.u32 2, %s22
        %p218 = scmp.lt.s32.totalorder %s217, 1
        %s219 = scalar_select %p218, %s217, 1
        %s220 = smul.addr %s219, 8
        %s221 = scalar_lea.vmem %s2, %s220
        %s222 = smul.u32 2, %s22
        %p223 = scmp.lt.s32.totalorder %s21, 1
        %s224 = scalar_select %p223, %s21, 1
        %s225 = smul.addr %s224, 3
        %s226 = smul.addr %s225, 8
        %s227 = scalar_lea.vmem %s3, %s226
        %v228 = vld [vmem:[%s1] sm:$0xff]
        %v229 = vld [vmem:[%s189] sm:$0xff]
        %v230 = vld [vmem:[%s189 + $0x8] sm:$0xff]
        %vm231 = vcmask 130048
        %v233 = vsel %vm231, %v228, 0
        %235 = vmatprep.subr.mxu0 0.0
        %236 = vmatpush1.msra.mxu0 0.0
        %237 = vmatprep.subr.mxu0 0.0
        %238 = vmatpush1.msra.mxu0 0.0
        %239 = vmatprep.subr.mxu0 0.0
        %240 = vmatpush1.msra.mxu0 0.0
        %241 = vmatprep.subr.mxu0 0.0
        %242 = vmatpush1.msra.mxu0 0.0
        %243 = vmatprep.subr.mxu0 0.0
        %244 = vmatpush1.msra.mxu0 0.0
        %245 = vmatprep.subr.mxu0 0.0
        %246 = vmatpush1.msra.mxu0 0.0
        %247 = vmatprep.subr.mxu0 0.0
        %248 = vmatpush1.msra.mxu0 0.0
        %249 = vmatprep.subr.mxu0 0.0
        %250 = vmatpush1.msra.mxu0 0.0
        %251 = vmatprep.subr.mxu0 0.0
        %252 = vmatpush1.msra.mxu0 0.0
        %253 = vmatprep.subr.mxu0 0.0
        %254 = vmatpush1.msra.mxu0 0.0
        %255 = vmatprep.subr.mxu0 0.0
        %256 = vmatpush1.msra.mxu0 0.0
        %257 = vmatprep.subr.mxu0 0.0
        %258 = vmatpush1.msra.mxu0 0.0
        %259 = vmatprep.subr.mxu0 0.0
        %260 = vmatpush1.msra.mxu0 0.0
        %261 = vmatprep.subr.mxu0 0.0
        %262 = vmatpush1.msra.mxu0 0.0
        %263 = vmatprep.subr.mxu0 0.0
        %264 = vmatpush1.msra.mxu0 %v230
        %265 = vmatprep.subr.mxu0 0.0
        %266 = vmatpush1.msra.mxu0 %v229
        %267 = vmatprep.subr.mxu0 0.0
        %268 = vmatpush2.msra.mxu0 0.0
        %269 = vmatprep.subr.mxu0 0.0
        %270 = vmatpush2.msra.mxu0 0.0
        %271 = vmatprep.subr.mxu0 0.0
        %272 = vmatpush2.msra.mxu0 0.0
        %273 = vmatprep.subr.mxu0 0.0
        %274 = vmatpush2.msra.mxu0 0.0
        %275 = vmatprep.subr.mxu0 0.0
        %276 = vmatpush2.msra.mxu0 0.0
        %277 = vmatprep.subr.mxu0 0.0
        %278 = vmatpush2.msra.mxu0 0.0
        %279 = vmatprep.subr.mxu0 0.0
        %280 = vmatpush2.msra.mxu0 0.0
        %281 = vmatprep.subr.mxu0 0.0
        %282 = vmatpush2.msra.mxu0 0.0
        %283 = vmatprep.subr.mxu0 0.0
        %284 = vmatpush2.msra.mxu0 0.0
        %285 = vmatprep.subr.mxu0 0.0
        %286 = vmatpush2.msra.mxu0 0.0
        %287 = vmatprep.subr.mxu0 0.0
        %288 = vmatpush2.msra.mxu0 0.0
        %289 = vmatprep.subr.mxu0 0.0
        %290 = vmatpush2.msra.mxu0 0.0
        %291 = vmatprep.subr.mxu0 0.0
        %292 = vmatpush2.msra.mxu0 0.0
        %293 = vmatprep.subr.mxu0 0.0
        %294 = vmatpush2.msra.mxu0 0.0
        %295 = vmatprep.subr.mxu0 0.0
        %296 = vmatpush2.msra.mxu0 0.0
        %297 = vmatprep.subr.mxu0 0.0
        %298 = vmatpush2.msra.mxu0 0.0
        %299 = vmatprep.mubr.f32.mxu0 0.0
        %300 = vmatmul.mubr.f32.gmra.mxu0 %v233
        %v301 = vpop.f32.mrf.mxu0
        %v302 = vadd.f32 0.0, %v301
        %v303 = vpop.f32.mrf.mxu0
        %304 = vdwg.mxu0
        %s305 = scalar_lea.vmem %s189, 16 [#allocation2]
        %v306 = vld [vmem:[%s305] sm:$0xff]
        %v307 = vld [vmem:[%s305 + $0x8] sm:$0xff]
        %308 = vmatprep.subr.mxu0 0.0
        %309 = vmatpush1.msra.mxu0 0.0
        %310 = vmatprep.subr.mxu0 0.0
        %311 = vmatpush1.msra.mxu0 0.0
        %312 = vmatprep.subr.mxu0 0.0
        %313 = vmatpush1.msra.mxu0 0.0
        %314 = vmatprep.subr.mxu0 0.0
        %315 = vmatpush1.msra.mxu0 0.0
        %316 = vmatprep.subr.mxu0 0.0
        %317 = vmatpush1.msra.mxu0 0.0
        %318 = vmatprep.subr.mxu0 0.0
        %319 = vmatpush1.msra.mxu0 0.0
        %320 = vmatprep.subr.mxu0 0.0
        %321 = vmatpush1.msra.mxu0 0.0
        %322 = vmatprep.subr.mxu0 0.0
        %323 = vmatpush1.msra.mxu0 0.0
        %324 = vmatprep.subr.mxu0 0.0
        %325 = vmatpush1.msra.mxu0 0.0
        %326 = vmatprep.subr.mxu0 0.0
        %327 = vmatpush1.msra.mxu0 0.0
        %328 = vmatprep.subr.mxu0 0.0
        %329 = vmatpush1.msra.mxu0 0.0
        %330 = vmatprep.subr.mxu0 0.0
        %331 = vmatpush1.msra.mxu0 0.0
        %332 = vmatprep.subr.mxu0 0.0
        %333 = vmatpush1.msra.mxu0 0.0
        %334 = vmatprep.subr.mxu0 0.0
        %335 = vmatpush1.msra.mxu0 0.0
        %336 = vmatprep.subr.mxu0 0.0
        %337 = vmatpush1.msra.mxu0 %v307
        %338 = vmatprep.subr.mxu0 0.0
        %339 = vmatpush1.msra.mxu0 %v306
        %340 = vmatprep.subr.mxu0 0.0
        %341 = vmatpush2.msra.mxu0 0.0
        %342 = vmatprep.subr.mxu0 0.0
        %343 = vmatpush2.msra.mxu0 0.0
        %344 = vmatprep.subr.mxu0 0.0
        %345 = vmatpush2.msra.mxu0 0.0
        %346 = vmatprep.subr.mxu0 0.0
        %347 = vmatpush2.msra.mxu0 0.0
        %348 = vmatprep.subr.mxu0 0.0
        %349 = vmatpush2.msra.mxu0 0.0
        %350 = vmatprep.subr.mxu0 0.0
        %351 = vmatpush2.msra.mxu0 0.0
        %352 = vmatprep.subr.mxu0 0.0
        %353 = vmatpush2.msra.mxu0 0.0
        %354 = vmatprep.subr.mxu0 0.0
        %355 = vmatpush2.msra.mxu0 0.0
        %356 = vmatprep.subr.mxu0 0.0
        %357 = vmatpush2.msra.mxu0 0.0
        %358 = vmatprep.subr.mxu0 0.0
        %359 = vmatpush2.msra.mxu0 0.0
        %360 = vmatprep.subr.mxu0 0.0
        %361 = vmatpush2.msra.mxu0 0.0
        %362 = vmatprep.subr.mxu0 0.0
        %363 = vmatpush2.msra.mxu0 0.0
        %364 = vmatprep.subr.mxu0 0.0
        %365 = vmatpush2.msra.mxu0 0.0
        %366 = vmatprep.subr.mxu0 0.0
        %367 = vmatpush2.msra.mxu0 0.0
        %368 = vmatprep.subr.mxu0 0.0
        %369 = vmatpush2.msra.mxu0 0.0
        %370 = vmatprep.subr.mxu0 0.0
        %371 = vmatpush2.msra.mxu0 0.0
        %372 = vmatprep.mubr.f32.mxu0 0.0
        %373 = vmatmul.mubr.f32.gmra.mxu0 %v233
        %v374 = vpop.f32.mrf.mxu0
        %v375 = vadd.f32 0.0, %v374
        %v376 = vpop.f32.mrf.mxu0
        %377 = vdwg.mxu0
        %s378 = scalar_lea.vmem %s189, 32 [#allocation2]
        %v379 = vld [vmem:[%s378] sm:$0xff]
        %v380 = vld [vmem:[%s378 + $0x8] sm:$0xff]
        %381 = vmatprep.subr.mxu0 0.0
        %382 = vmatpush1.msra.mxu0 0.0
        %383 = vmatprep.subr.mxu0 0.0
        %384 = vmatpush1.msra.mxu0 0.0
        %385 = vmatprep.subr.mxu0 0.0
        %386 = vmatpush1.msra.mxu0 0.0
        %387 = vmatprep.subr.mxu0 0.0
        %388 = vmatpush1.msra.mxu0 0.0
        %389 = vmatprep.subr.mxu0 0.0
        %390 = vmatpush1.msra.mxu0 0.0
        %391 = vmatprep.subr.mxu0 0.0
        %392 = vmatpush1.msra.mxu0 0.0
        %393 = vmatprep.subr.mxu0 0.0
        %394 = vmatpush1.msra.mxu0 0.0
        %395 = vmatprep.subr.mxu0 0.0
        %396 = vmatpush1.msra.mxu0 0.0
        %397 = vmatprep.subr.mxu0 0.0
        %398 = vmatpush1.msra.mxu0 0.0
        %399 = vmatprep.subr.mxu0 0.0
        %400 = vmatpush1.msra.mxu0 0.0
        %401 = vmatprep.subr.mxu0 0.0
        %402 = vmatpush1.msra.mxu0 0.0
        %403 = vmatprep.subr.mxu0 0.0
        %404 = vmatpush1.msra.mxu0 0.0
        %405 = vmatprep.subr.mxu0 0.0
        %406 = vmatpush1.msra.mxu0 0.0
        %407 = vmatprep.subr.mxu0 0.0
        %408 = vmatpush1.msra.mxu0 0.0
        %409 = vmatprep.subr.mxu0 0.0
        %410 = vmatpush1.msra.mxu0 %v380
        %411 = vmatprep.subr.mxu0 0.0
        %412 = vmatpush1.msra.mxu0 %v379
        %413 = vmatprep.subr.mxu0 0.0
        %414 = vmatpush2.msra.mxu0 0.0
        %415 = vmatprep.subr.mxu0 0.0
        %416 = vmatpush2.msra.mxu0 0.0
        %417 = vmatprep.subr.mxu0 0.0
        %418 = vmatpush2.msra.mxu0 0.0
        %419 = vmatprep.subr.mxu0 0.0
        %420 = vmatpush2.msra.mxu0 0.0
        %421 = vmatprep.subr.mxu0 0.0
        %422 = vmatpush2.msra.mxu0 0.0
        %423 = vmatprep.subr.mxu0 0.0
        %424 = vmatpush2.msra.mxu0 0.0
        %425 = vmatprep.subr.mxu0 0.0
        %426 = vmatpush2.msra.mxu0 0.0
        %427 = vmatprep.subr.mxu0 0.0
        %428 = vmatpush2.msra.mxu0 0.0
        %429 = vmatprep.subr.mxu0 0.0
        %430 = vmatpush2.msra.mxu0 0.0
        %431 = vmatprep.subr.mxu0 0.0
        %432 = vmatpush2.msra.mxu0 0.0
        %433 = vmatprep.subr.mxu0 0.0
        %434 = vmatpush2.msra.mxu0 0.0
        %435 = vmatprep.subr.mxu0 0.0
        %436 = vmatpush2.msra.mxu0 0.0
        %437 = vmatprep.subr.mxu0 0.0
        %438 = vmatpush2.msra.mxu0 0.0
        %439 = vmatprep.subr.mxu0 0.0
        %440 = vmatpush2.msra.mxu0 0.0
        %441 = vmatprep.subr.mxu0 0.0
        %442 = vmatpush2.msra.mxu0 0.0
        %443 = vmatprep.subr.mxu0 0.0
        %444 = vmatpush2.msra.mxu0 0.0
        %445 = vmatprep.mubr.f32.mxu0 0.0
        %446 = vmatmul.mubr.f32.gmra.mxu0 %v233
        %v447 = vpop.f32.mrf.mxu0
        %v448 = vadd.f32 0.0, %v447
        %v449 = vpop.f32.mrf.mxu0
        %450 = vdwg.mxu0
        %v451 = vld [vmem:[%s221] sm:$0xff]
        %v452 = vld [vmem:[%s221 + $0x8] sm:$0xff]
        %v454 = vsel %vm231, %v302, 0
        %v457 = vsel %vm231, %v375, 0
        %v460 = vsel %vm231, %v448, 0
        %462 = vmatprep.subr.mxu0 0.0
        %463 = vmatpush1.msra.mxu0 0.0
        %464 = vmatprep.subr.mxu0 0.0
        %465 = vmatpush1.msra.mxu0 0.0
        %466 = vmatprep.subr.mxu0 0.0
        %467 = vmatpush1.msra.mxu0 0.0
        %468 = vmatprep.subr.mxu0 0.0
        %469 = vmatpush1.msra.mxu0 0.0
        %470 = vmatprep.subr.mxu0 0.0
        %471 = vmatpush1.msra.mxu0 0.0
        %472 = vmatprep.subr.mxu0 0.0
        %473 = vmatpush1.msra.mxu0 0.0
        %474 = vmatprep.subr.mxu0 0.0
        %475 = vmatpush1.msra.mxu0 0.0
        %476 = vmatprep.subr.mxu0 0.0
        %477 = vmatpush1.msra.mxu0 0.0
        %478 = vmatprep.subr.mxu0 0.0
        %479 = vmatpush1.msra.mxu0 0.0
        %480 = vmatprep.subr.mxu0 0.0
        %481 = vmatpush1.msra.mxu0 0.0
        %482 = vmatprep.subr.mxu0 0.0
        %483 = vmatpush1.msra.mxu0 0.0
        %484 = vmatprep.subr.mxu0 0.0
        %485 = vmatpush1.msra.mxu0 0.0
        %486 = vmatprep.subr.mxu0 0.0
        %487 = vmatpush1.msra.mxu0 0.0
        %488 = vmatprep.subr.mxu0 0.0
        %489 = vmatpush1.msra.mxu0 0.0
        %490 = vmatprep.subr.mxu0 0.0
        %491 = vmatpush1.msra.mxu0 %v452
        %492 = vmatprep.subr.mxu0 0.0
        %493 = vmatpush1.msra.mxu0 %v451
        %494 = vmatprep.subr.mxu0 0.0
        %495 = vmatpush2.msra.mxu0 0.0
        %496 = vmatprep.subr.mxu0 0.0
        %497 = vmatpush2.msra.mxu0 0.0
        %498 = vmatprep.subr.mxu0 0.0
        %499 = vmatpush2.msra.mxu0 0.0
        %500 = vmatprep.subr.mxu0 0.0
        %501 = vmatpush2.msra.mxu0 0.0
        %502 = vmatprep.subr.mxu0 0.0
        %503 = vmatpush2.msra.mxu0 0.0
        %504 = vmatprep.subr.mxu0 0.0
        %505 = vmatpush2.msra.mxu0 0.0
        %506 = vmatprep.subr.mxu0 0.0
        %507 = vmatpush2.msra.mxu0 0.0
        %508 = vmatprep.subr.mxu0 0.0
        %509 = vmatpush2.msra.mxu0 0.0
        %510 = vmatprep.subr.mxu0 0.0
        %511 = vmatpush2.msra.mxu0 0.0
        %512 = vmatprep.subr.mxu0 0.0
        %513 = vmatpush2.msra.mxu0 0.0
        %514 = vmatprep.subr.mxu0 0.0
        %515 = vmatpush2.msra.mxu0 0.0
        %516 = vmatprep.subr.mxu0 0.0
        %517 = vmatpush2.msra.mxu0 0.0
        %518 = vmatprep.subr.mxu0 0.0
        %519 = vmatpush2.msra.mxu0 0.0
        %520 = vmatprep.subr.mxu0 0.0
        %521 = vmatpush2.msra.mxu0 0.0
        %522 = vmatprep.subr.mxu0 0.0
        %523 = vmatpush2.msra.mxu0 0.0
        %524 = vmatprep.subr.mxu0 0.0
        %525 = vmatpush2.msra.mxu0 0.0
        %526 = vmatprep.mubr.f32.mxu0 0.0
        %527 = vmatmul.mubr.f32.gmra.mxu0 %v454
        %v528 = vpop.f32.mrf.mxu0
        %v529 = vadd.f32 0.0, %v528
        %v530 = vpop.f32.mrf.mxu0
        %531 = vmatprep.mubr.f32.mxu0 0.0
        %532 = vmatmul.mubr.f32.gmra.mxu0 %v457
        %v533 = vpop.f32.mrf.mxu0
        %v534 = vadd.f32 0.0, %v533
        %v535 = vpop.f32.mrf.mxu0
        %536 = vmatprep.mubr.f32.mxu0 0.0
        %537 = vmatmul.mubr.f32.gmra.mxu0 %v460
        %v538 = vpop.f32.mrf.mxu0
        %v539 = vadd.f32 0.0, %v538
        %v540 = vpop.f32.mrf.mxu0
        %541 = vdwg.mxu0
        %p542 = scmp.eq.s32.totalorder %s22, 0
        // Predicated region
        $region37: #{tpu_custom_call.1} parent=31 // pred_check
          %p543 = pneg %p542
        $region38: #{tpu_custom_call.1} parent=31 // pred_check_branch
          %545 = sbr.rel (%p543) target = $region40
        $region39: #{tpu_custom_call.1} parent=31 // pred_region
          %vm546 = vcmask 64512
          %547 = vst.msk [vmem:[%s227] sm:$0xff] %vm546, 0.0
          %548 = vst.msk [vmem:[%s227 + $0x8] sm:$0xff] %vm546, 0.0
          %549 = vst.msk [vmem:[%s227 + $0x10] sm:$0xff] %vm546, 0.0
        $region40: #{tpu_custom_call.1} parent=31 // pred_fallthru
          _
        %v550 = vld [vmem:[%s227] sm:$0xff]
        %v551 = vld [vmem:[%s227 + $0x8] sm:$0xff]
        %v552 = vld [vmem:[%s227 + $0x10] sm:$0xff]
        %v553 = vadd.f32 %v550, %v529
        %v554 = vadd.f32 %v551, %v534
        %v555 = vadd.f32 %v552, %v539
        %vm556 = vcmask 64512
        %557 = vst.msk [vmem:[%s227] sm:$0xff] %vm556, %v553
        %558 = vst.msk [vmem:[%s227 + $0x8] sm:$0xff] %vm556, %v554
        %559 = vst.msk [vmem:[%s227 + $0x10] sm:$0xff] %vm556, %v555
        %p560 = scmp.lt.s32.totalorder %s21, 1
        %s561 = scalar_select %p560, %s21, 1
        %s562 = smul.addr %s561, 3
        %s563 = smul.addr %s562, 8
        %s564 = scalar_lea.vmem %s3, %s563
        // Predicated region
        $region41: #{tpu_custom_call.1} parent=31 // pred_check
          %p565 = pneg %p122
        $region42: #{tpu_custom_call.1} parent=31 // pred_check_branch
          %567 = sbr.rel (%p565) target = $region44
        $region43: #{tpu_custom_call.1} parent=31 // pred_region
          _
        $region44: #{tpu_custom_call.1} parent=31 // pred_fallthru
          _
      $region32: #{tpu_custom_call.1} parent=5 // pred_fallthru
        _
      %p568 = scmp.le.s32.totalorder 2, %s12
      // Predicated region
      $region45: #{tpu_custom_call.1} parent=5 // pred_check
        %p569 = pneg %p568
      $region46: #{tpu_custom_call.1} parent=5 // pred_check_branch
        %571 = sbr.rel (%p569) target = $region48
      $region47: #{tpu_custom_call.1} parent=5 // pred_region
        %s572 = ssub.s32 %s12, 2
        // Predicated region
        $region49: #{tpu_custom_call.1} parent=47 // pred_check
          %p573 = pneg %p128
        $region50: #{tpu_custom_call.1} parent=47 // pred_check_branch
          %575 = sbr.rel (%p573) target = $region52
        $region51: #{tpu_custom_call.1} parent=47 // pred_region
          %p576 = scmp.lt.s32.totalorder %s23, 1
          %s577 = scalar_select %p576, %s23, 1
          %s578 = smul.addr %s577, 3
          %s579 = smul.addr %s578, 8
          %s580 = scalar_lea.vmem %s3, %s579
        $region52: #{tpu_custom_call.1} parent=47 // pred_fallthru
          _
      $region48: #{tpu_custom_call.1} parent=5 // pred_fallthru
        _
    $region6: #{tpu_custom_call.1} parent=1 // loop_footer
      %s16 = sadd.s32 1, %s12
    $region7: #{tpu_custom_call.1} parent=1 // loop_footer_branch
      %11 = sbr.rel target = $region3
    $region8: #{tpu_custom_call.1} parent=1 // loop_exit
      _
    %581 = vsyncpa [#allocation3], 1
    %s582 = scalar_lea.sflag [#allocation3], 1
    %583 = vsyncpa %s582, 1

</llo_original>
